<compile_context>
chip_gen: v5e
topology: v5e:2x2
jax: 0.10.0
libtpu: 0.0.40
codegen_flags: <defaults>
</compile_context>

<pallas_src>
import functools

import jax
import jax.numpy as jnp
from jax import lax
from jax.experimental import pallas as pl
from jax.experimental.pallas import tpu as pltpu

_LANES = 128
_SUBLANES = 8
_PAIRS_PER_ROW = _LANES // 2                  # 64 score rows per 128-lane slab row
_ROW_QUANTUM = _PAIRS_PER_ROW * _SUBLANES     # 512 score rows -> 8 slab rows
_NEG_FILL = -1e30                             # softplus(_NEG_FILL) == 0 exactly


def _softplus(d):
    # Numerically stable softplus: max(d, 0) + log(1 + exp(-|d|)).
    # Exactly 0 for the _NEG_FILL masking value.
    return jnp.maximum(d, 0.0) + jnp.log(1.0 + jnp.exp(-jnp.abs(d)))


def _pair_softplus_sum_kernel(x_ref, out_ref, *, flip, valid_rows, block_rows):
    """Sum softplus(+/-(x0 - x1)) over one (block_rows, 128) slab block.

    The slab holds the flattened (N, 2) scores, so lanes 2k / 2k+1 of each
    row carry the class-0 / class-1 logits of one score row.
    """
    x = x_ref[...].astype(jnp.float32)          # upcast BEFORE the difference
    r = pltpu.roll(x, shift=1, axis=1)          # r[:, l] = x[:, l-1]  (XLU slot)
    # At odd lane 2k+1: r holds x0 of pair k, x holds x1 of pair k.
    d = (x - r) if flip else (r - x)            # flip=False: x0-x1, True: x1-x0
    lane = lax.broadcasted_iota(jnp.int32, d.shape, 1)
    row = lax.broadcasted_iota(jnp.int32, d.shape, 0) + pl.program_id(0) * block_rows
    valid = ((lane % 2) == 1) & (row < valid_rows)
    d = jnp.where(valid, d, _NEG_FILL)          # even lanes / OOB rows -> exactly 0
    sp = _softplus(d)
    # Lane-dense (8, 128) partial-sum tile, written once per grid step.
    out_ref[...] = jnp.sum(
        sp.reshape(block_rows // _SUBLANES, _SUBLANES, _LANES), axis=0)


def _side_softplus_sum(score, *, flip, max_block_rows, vmem_limit_bytes):
    """Sum of per-row softplus losses for one (N, 2) score array."""
    n = score.shape[0]
    n_main = (n // _ROW_QUANTUM) * _ROW_QUANTUM
    total = jnp.float32(0.0)

    if n_main < n:
        # Ragged tail (< 512 score rows): trivial jnp path, negligible traffic.
        tail = score[n_main:].astype(jnp.float32)
        d = tail[:, 1] - tail[:, 0] if flip else tail[:, 0] - tail[:, 1]
        total = total + jnp.sum(_softplus(d))

    if n_main > 0:
        main = score if n_main == n else score[:n_main]
        rows = n_main // _PAIRS_PER_ROW                       # multiple of 8
        block_rows = min(max((max_block_rows // _SUBLANES) * _SUBLANES,
                             _SUBLANES), rows)                # multiple of 8
        num_blocks = pl.cdiv(rows, block_rows)
        slab = main.reshape(rows, _LANES)                     # free bitcast reshape

        kernel = functools.partial(
            _pair_softplus_sum_kernel,
            flip=flip, valid_rows=rows, block_rows=block_rows)
        partials = pl.pallas_call(
            kernel,
            out_shape=jax.ShapeDtypeStruct((num_blocks * _SUBLANES, _LANES),
                                           jnp.float32),
            grid=(num_blocks,),
            in_specs=[pl.BlockSpec((block_rows, _LANES), lambda i: (i, 0))],
            out_specs=pl.BlockSpec((_SUBLANES, _LANES), lambda i: (i, 0)),
            compiler_params=pltpu.CompilerParams(
                dimension_semantics=("parallel",),
                vmem_limit_bytes=vmem_limit_bytes,
            ),
        )(slab)
        total = total + jnp.sum(partials)

    return total


def binary_loss(pos_score, neg_score, *, max_block_rows=16384,
                min_pallas_rows=65536, vmem_limit_bytes=32 * 1024 * 1024):
    """Pallas implementation of BinaryLoss.forward. Returns a scalar f32."""
    assert pos_score.ndim == 2 and neg_score.ndim == 2
    # TODO(synk): kernel exploits the binary (C == 2) closed form; general C
    # would need a row-wise logsumexp layout instead.
    assert pos_score.shape[1] == 2 and neg_score.shape[1] == 2

    n_pos, n_neg = pos_score.shape[0], neg_score.shape[0]
    denom = jnp.float32(n_pos + n_neg)

    if n_pos + n_neg < min_pallas_rows:
        # Small-batch fast path: pallas_call launch + per-step overhead would
        # dominate; plain XLA is faster here.
        p = pos_score.astype(jnp.float32)
        q = neg_score.astype(jnp.float32)
        total = (jnp.sum(_softplus(p[:, 0] - p[:, 1]))
                 + jnp.sum(_softplus(q[:, 1] - q[:, 0])))
        return total / denom

    total = (_side_softplus_sum(pos_score, flip=False,
                                max_block_rows=max_block_rows,
                                vmem_limit_bytes=vmem_limit_bytes)
             + _side_softplus_sum(neg_score, flip=True,
                                  max_block_rows=max_block_rows,
                                  vmem_limit_bytes=vmem_limit_bytes))
    return total / denom


def _reference(pos_score, neg_score):
    pos_ls = jax.nn.log_softmax(pos_score.astype(jnp.float32), axis=1)
    neg_ls = jax.nn.log_softmax(neg_score.astype(jnp.float32), axis=1)
    pos_loss = -pos_ls[:, 1]
    neg_loss = -neg_ls[:, 0]
    return (pos_loss.sum() + neg_loss.sum()) / (pos_loss.shape[0] + neg_loss.shape[0])


if __name__ == "__main__":
    key = jax.random.PRNGKey(0)
    k1, k2, k3, k4, k5, k6 = jax.random.split(key, 6)

    # 1) Small shapes matching the module's typical use: fast (jnp) path.
    pos_small = jax.random.normal(k1, (8, 2), dtype=jnp.float32)
    neg_small = jax.random.normal(k2, (8, 2), dtype=jnp.float32)
    loss = binary_loss(pos_small, neg_small)
    jax.block_until_ready(loss)
    ref = _reference(pos_small, neg_small)
    assert jnp.allclose(loss, ref, atol=1e-5, rtol=1e-5), (loss, ref)

    # 2) Pallas path, 512-aligned sizes: fully fused single read, no tail.
    pos_a = jax.random.normal(k3, (4096, 2), dtype=jnp.float32)
    neg_a = jax.random.normal(k4, (2048, 2), dtype=jnp.float32)
    loss_a = binary_loss(pos_a, neg_a, min_pallas_rows=0)
    jax.block_until_ready(loss_a)
    ref_a = _reference(pos_a, neg_a)
    assert jnp.allclose(loss_a, ref_a, atol=1e-5, rtol=1e-5), (loss_a, ref_a)

    # 3) Pallas path, ragged sizes + small block: multi-block grid, partial
    #    last block (in-kernel row masking) and the jnp tail path.
    pos_b = jax.random.normal(k5, (3000, 2), dtype=jnp.float32)
    neg_b = jax.random.normal(k6, (1500, 2), dtype=jnp.float32)
    loss_b = binary_loss(pos_b, neg_b, max_block_rows=16, min_pallas_rows=0)
    jax.block_until_ready(loss_b)
    ref_b = _reference(pos_b, neg_b)
    assert jnp.allclose(loss_b, ref_b, atol=1e-5, rtol=1e-5), (loss_b, ref_b)

    print("KERNEL_OK")
</pallas_src>

<mosaic_0001>
module attributes {stable_mosaic.version = 11 : i64} {
  func.func @_pair_softplus_sum_kernel(%arg0: i32, %arg1: memref<64x128xf32, #tpu.memory_space<vmem>>, %arg2: memref<8x128xf32, #tpu.memory_space<vmem>>) attributes {dimension_semantics = [#tpu.dimension_semantics<parallel>], iteration_bounds = array<i64: 1>, scalar_prefetch = 0 : i64, scratch_operands = 0 : i64, tpu.core_type = #tpu.core_type<tc>, window_params = [{transform_indices = @transform_0, window_bounds = array<i64: 64, 128>}, {transform_indices = @transform_1, window_bounds = array<i64: 8, 128>}]} {
    %c0 = arith.constant 0 : index
    %c0_0 = arith.constant 0 : index
    %0 = vector.load %arg1[%c0, %c0_0] : memref<64x128xf32, #tpu.memory_space<vmem>>, vector<64x128xf32>
    %c1_i32 = arith.constant 1 : i32
    %1 = tpu.dynamic_rotate %0 by %c1_i32 dim 1 : vector<64x128xf32>, i32 -> vector<64x128xf32>
    %2 = arith.subf %1, %0 : vector<64x128xf32>
    %3 = tpu.iota {dimensions = array<i32: 1>} : vector<64x128xi32>
    %4 = tpu.iota {dimensions = array<i32: 0>} : vector<64x128xi32>
    %c64_i32 = arith.constant 64 : i32
    %5 = arith.muli %arg0, %c64_i32 : i32
    %6 = vector.broadcast %5 : i32 to vector<64x128xi32>
    %7 = arith.addi %4, %6 : vector<64x128xi32>
    %c2_i32 = arith.constant 2 : i32
    %c0_i32 = arith.constant 0 : i32
    %8 = arith.cmpi eq, %c2_i32, %c0_i32 : i32
    %c1_i32_1 = arith.constant 1 : i32
    %9 = arith.select %8, %c1_i32_1, %c2_i32 : i32
    %10 = vector.broadcast %9 : i32 to vector<64x128xi32>
    %11 = arith.remsi %3, %10 : vector<64x128xi32>
    %c0_i32_2 = arith.constant 0 : i32
    %12 = vector.broadcast %c0_i32_2 : i32 to vector<64x128xi32>
    %13 = arith.cmpi ne, %11, %12 : vector<64x128xi32>
    %c0_i32_3 = arith.constant 0 : i32
    %14 = vector.broadcast %c0_i32_3 : i32 to vector<64x128xi32>
    %15 = arith.cmpi slt, %11, %14 : vector<64x128xi32>
    %c0_i32_4 = arith.constant 0 : i32
    %16 = arith.cmpi slt, %9, %c0_i32_4 : i32
    %17 = vector.broadcast %16 : i1 to vector<64x128xi1>
    %18 = vector.broadcast %17 : vector<64x128xi1> to vector<64x128xi1>
    %19 = arith.xori %15, %18 : vector<64x128xi1>
    %20 = arith.andi %19, %13 : vector<64x128xi1>
    %21 = vector.broadcast %9 : i32 to vector<64x128xi32>
    %22 = arith.addi %11, %21 : vector<64x128xi32>
    %23 = arith.select %20, %22, %11 : vector<64x128xi1>, vector<64x128xi32>
    %c1_i32_5 = arith.constant 1 : i32
    %24 = vector.broadcast %c1_i32_5 : i32 to vector<64x128xi32>
    %25 = arith.cmpi eq, %23, %24 : vector<64x128xi32>
    %c64_i32_6 = arith.constant 64 : i32
    %26 = vector.broadcast %c64_i32_6 : i32 to vector<64x128xi32>
    %27 = arith.cmpi slt, %7, %26 : vector<64x128xi32>
    %28 = arith.andi %25, %27 : vector<64x128xi1>
    %cst = arith.constant -1.000000e+30 : f32
    %29 = vector.broadcast %cst : f32 to vector<64x128xf32>
    %30 = arith.select %28, %2, %29 : vector<64x128xi1>, vector<64x128xf32>
    %cst_7 = arith.constant 0.000000e+00 : f32
    %31 = vector.broadcast %cst_7 : f32 to vector<64x128xf32>
    %32 = arith.maximumf %30, %31 : vector<64x128xf32>
    %33 = math.absf %30 : vector<64x128xf32>
    %cst_8 = arith.constant 0.000000e+00 : f32
    %34 = vector.broadcast %cst_8 : f32 to vector<64x128xf32>
    %35 = arith.subf %34, %33 : vector<64x128xf32>
    %36 = math.exp %35 : vector<64x128xf32>
    %cst_9 = arith.constant 1.000000e+00 : f32
    %37 = vector.broadcast %cst_9 : f32 to vector<64x128xf32>
    %38 = arith.addf %37, %36 : vector<64x128xf32>
    %39 = math.log %38 : vector<64x128xf32>
    %40 = arith.addf %32, %39 : vector<64x128xf32>
    %41 = vector.shape_cast %40 : vector<64x128xf32> to vector<8x8x128xf32>
    %cst_10 = arith.constant dense<0.000000e+00> : vector<8x128xf32>
    %42 = vector.multi_reduction <add>, %41, %cst_10 [0] : vector<8x8x128xf32> to vector<8x128xf32>
    %c0_11 = arith.constant 0 : index
    %c0_12 = arith.constant 0 : index
    %43 = vector.load %arg2[%c0_11, %c0_12] : memref<8x128xf32, #tpu.memory_space<vmem>>, vector<8x128xf32>
    tpu.vector_store %arg2[%c0_11, %c0_12], %42 {strides = array<i32>} : memref<8x128xf32, #tpu.memory_space<vmem>>, vector<8x128xf32>,
    return
  }
  func.func @transform_0(%arg0: i32) -> (i32, i32) {
    %c0_i32 = arith.constant 0 : i32
    %c0_i32_0 = arith.constant 0 : i32
    return %arg0, %c0_i32 : i32, i32
  }
  func.func @transform_1(%arg0: i32) -> (i32, i32) {
    %c0_i32 = arith.constant 0 : i32
    %c0_i32_0 = arith.constant 0 : i32
    return %arg0, %c0_i32 : i32, i32
  }
}

</mosaic_0001>

<llo_original>
// kernel: tpu_custom_call.1
$region0: #{tpu_custom_call.1}
  #allocation0 [shape = 'u32[]', space=smem, size = 0x4, offset = 0x4, fixed_abs, tag = 'smem constant byte address 0x4 - core index']
  #allocation1 [shape = 'u32[72,128]{1,0:T(1,128)}', space=vmem, size = 0x9000, scoped, tag = 'internal scratch']
  %s0 = inlined_call_operand.hbm [shape: f32[64,128], index: 0, kind: input, shape index: {}]
  %s1 = inlined_call_operand.hbm [shape: f32[8,128], index: 1, kind: output, shape index: {}]
  %s2 = sld [smem:[#allocation0]]
  $region18: #{tpu_custom_call.1} parent=0
    _
  %s4 = ssub.s32 1, %s2
  %s5 = scalar_select 0, %s4, %s2
  $region1: #{tpu_custom_call.1} parent=0
    #allocation2 [shape = 'u8[32768]{0}', space=vmem, size = 0x8000, scoped, tag = 'input window, operand 0, single buffered']
    #allocation3 [shape = 's32[1]{0}', space=sflag, size = 0x4, scoped, tag = 'scoped memory for tpu_custom_call.1']
    #allocation4 [shape = 's32[1]{0}', space=sflag, size = 0x4, scoped, tag = 'scoped memory for tpu_custom_call.1']
    #allocation5 [shape = 'u8[4096]{0}', space=vmem, size = 0x1000, scoped, tag = 'output window, operand 0, single buffered']
    %6 = vsyncpa [#allocation3], 0
    %7 = vsyncpa [#allocation4], 0
    // Predicated region
    $region2: #{tpu_custom_call.1} parent=1 // pred_check
      _
    $region3: #{tpu_custom_call.1} parent=1 // pred_check_branch
      %9 = sbr.rel (0) target = $region5
    $region4: #{tpu_custom_call.1} parent=1 // pred_region
      %11 = vsyncadd [#allocation3], 0
      %s12 = sshll.u32 %s0, 4
      %s13 = int_to_ptr.hbm [resolvable:$true] %s12
      %s14 = sshll.u32 [#allocation2], 4
      %s15 = int_to_ptr.vmem [resolvable:$true] %s14
      %20 = dma.hbm_to_vmem [thread:$0]  %s13, 1024, %s15, [#allocation3], 128, 128, 8
    $region5: #{tpu_custom_call.1} parent=1 // pred_fallthru
      _
    // Predicated region
    $region6: #{tpu_custom_call.1} parent=1 // pred_check
      _
    $region7: #{tpu_custom_call.1} parent=1 // pred_check_branch
      %22 = sbr.rel (0) target = $region9
    $region8: #{tpu_custom_call.1} parent=1 // pred_region
      %24 = dma.done [#allocation3], 1024
    $region9: #{tpu_custom_call.1} parent=1 // pred_fallthru
      _
    %v25 = vld [vmem:[#allocation2] sm:$0xff]
    %v26 = vld [vmem:[#allocation2 + $0x8] sm:$0xff]
    %v27 = vld [vmem:[#allocation2 + $0x10] sm:$0xff]
    %v28 = vld [vmem:[#allocation2 + $0x18] sm:$0xff]
    %v29 = vld [vmem:[#allocation2 + $0x20] sm:$0xff]
    %v30 = vld [vmem:[#allocation2 + $0x28] sm:$0xff]
    %v31 = vld [vmem:[#allocation2 + $0x30] sm:$0xff]
    %v32 = vld [vmem:[#allocation2 + $0x38] sm:$0xff]
    %33 = vrot.lane.b32.xlu0 %v25, 1
    %v34 = vpop.permute.xlu0 %33
    %35 = vrot.lane.b32.xlu0 %v26, 1
    %v36 = vpop.permute.xlu0 %35
    %37 = vrot.lane.b32.xlu0 %v27, 1
    %v38 = vpop.permute.xlu0 %37
    %39 = vrot.lane.b32.xlu0 %v28, 1
    %v40 = vpop.permute.xlu0 %39
    %41 = vrot.lane.b32.xlu0 %v29, 1
    %v42 = vpop.permute.xlu0 %41
    %43 = vrot.lane.b32.xlu0 %v30, 1
    %v44 = vpop.permute.xlu0 %43
    %45 = vrot.lane.b32.xlu0 %v31, 1
    %v46 = vpop.permute.xlu0 %45
    %47 = vrot.lane.b32.xlu0 %v32, 1
    %v48 = vpop.permute.xlu0 %47
    %v49 = vsub.f32 %v34, %v25
    %v50 = vsub.f32 %v36, %v26
    %v51 = vsub.f32 %v38, %v27
    %v52 = vsub.f32 %v40, %v28
    %v53 = vsub.f32 %v42, %v29
    %v54 = vsub.f32 %v44, %v30
    %v55 = vsub.f32 %v46, %v31
    %v56 = vsub.f32 %v48, %v32
    %v57 = vlaneseq
    %v58 = vand.u32 %v57, 127
    %v59 = vlaneseq
    %v60 = vshrl.u32 %v59, 7
    %v61 = vadd.s32 %v60, 8
    %v62 = vadd.s32 %v60, 16
    %v63 = vadd.s32 %v60, 24
    %v64 = vadd.s32 %v60, 32
    %v65 = vadd.s32 %v60, 40
    %v66 = vadd.s32 %v60, 48
    %v67 = vadd.s32 %v60, 56
    %s68 = smul.u32 0, 64
    %v69 = vstv %s68
    %v70 = vadd.s32 %v60, %v69
    %v71 = vadd.s32 %v61, %v69
    %v72 = vadd.s32 %v62, %v69
    %v73 = vadd.s32 %v63, %v69
    %v74 = vadd.s32 %v64, %v69
    %v75 = vadd.s32 %v65, %v69
    %v76 = vadd.s32 %v66, %v69
    %v77 = vadd.s32 %v67, %v69
    %vm78 = vcmp.lt.s32.totalorder %v58, 0
    %v79 = vsub.s32 0, %v58
    %v80 = vsel %vm78, %v79, %v58
    %v81 = vshrl.u32 %v80, 1
    %v82 = vand.u32 %v80, 1
    %v83 = vsub.s32 0, %v82
    %v84 = vsel %vm78, %v83, %v82
    %vm85 = vcmp.ne.s32.totalorder %v84, 0
    %vm86 = vcmp.lt.s32.totalorder %v84, 0
    %vm87 = vmand %vm86, %vm85
    %v88 = vadd.s32 %v84, 2
    %v89 = vsel %vm87, %v88, %v84
    %vm90 = vcmp.eq.s32.totalorder %v89, 1
    %vm91 = vcmp.lt.s32.totalorder %v70, 64
    %vm92 = vcmp.lt.s32.totalorder %v71, 64
    %vm93 = vcmp.lt.s32.totalorder %v72, 64
    %vm94 = vcmp.lt.s32.totalorder %v73, 64
    %vm95 = vcmp.lt.s32.totalorder %v74, 64
    %vm96 = vcmp.lt.s32.totalorder %v75, 64
    %vm97 = vcmp.lt.s32.totalorder %v76, 64
    %vm98 = vcmp.lt.s32.totalorder %v77, 64
    %vm99 = vmand %vm90, %vm91
    %vm100 = vmand %vm90, %vm92
    %vm101 = vmand %vm90, %vm93
    %vm102 = vmand %vm90, %vm94
    %vm103 = vmand %vm90, %vm95
    %vm104 = vmand %vm90, %vm96
    %vm105 = vmand %vm90, %vm97
    %vm106 = vmand %vm90, %vm98
    %v107 = vsel %vm99, %v49, -1e+30
    %v108 = vsel %vm100, %v50, -1e+30
    %v109 = vsel %vm101, %v51, -1e+30
    %v110 = vsel %vm102, %v52, -1e+30
    %v111 = vsel %vm103, %v53, -1e+30
    %v112 = vsel %vm104, %v54, -1e+30
    %v113 = vsel %vm105, %v55, -1e+30
    %v114 = vsel %vm106, %v56, -1e+30
    %v115 = vmax.f32 %v107, 0.0
    %v116 = vmax.f32 %v108, 0.0
    %v117 = vmax.f32 %v109, 0.0
    %v118 = vmax.f32 %v110, 0.0
    %v119 = vmax.f32 %v111, 0.0
    %v120 = vmax.f32 %v112, 0.0
    %v121 = vmax.f32 %v113, 0.0
    %v122 = vmax.f32 %v114, 0.0
    %v123 = vand.u32 2147483647, %v107
    %v124 = vand.u32 2147483647, %v108
    %v125 = vand.u32 2147483647, %v109
    %v126 = vand.u32 2147483647, %v110
    %v127 = vand.u32 2147483647, %v111
    %v128 = vand.u32 2147483647, %v112
    %v129 = vand.u32 2147483647, %v113
    %v130 = vand.u32 2147483647, %v114
    %v131 = vsub.f32 0.0, %v123
    %v132 = vsub.f32 0.0, %v124
    %v133 = vsub.f32 0.0, %v125
    %v134 = vsub.f32 0.0, %v126
    %v135 = vsub.f32 0.0, %v127
    %v136 = vsub.f32 0.0, %v128
    %v137 = vsub.f32 0.0, %v129
    %v138 = vsub.f32 0.0, %v130
    %v139 = vmul.f32 %v131, 1.442695
    %v140 = vpow.pop %v139
    %v141 = vmul.f32 %v132, 1.442695
    %v142 = vpow.pop %v141
    %v143 = vmul.f32 %v133, 1.442695
    %v144 = vpow.pop %v143
    %v145 = vmul.f32 %v134, 1.442695
    %v146 = vpow.pop %v145
    %v147 = vmul.f32 %v135, 1.442695
    %v148 = vpow.pop %v147
    %v149 = vmul.f32 %v136, 1.442695
    %v150 = vpow.pop %v149
    %v151 = vmul.f32 %v137, 1.442695
    %v152 = vpow.pop %v151
    %v153 = vmul.f32 %v138, 1.442695
    %v154 = vpow.pop %v153
    %v155 = vadd.f32 %v140, 1.0
    %v156 = vadd.f32 %v142, 1.0
    %v157 = vadd.f32 %v144, 1.0
    %v158 = vadd.f32 %v146, 1.0
    %v159 = vadd.f32 %v148, 1.0
    %v160 = vadd.f32 %v150, 1.0
    %v161 = vadd.f32 %v152, 1.0
    %v162 = vadd.f32 %v154, 1.0
    %v163 = vlog2.pop %v155
    %v164 = vmul.f32 %v163, 0.6931472
    %v165 = vlog2.pop %v156
    %v166 = vmul.f32 %v165, 0.6931472
    %v167 = vlog2.pop %v157
    %v168 = vmul.f32 %v167, 0.6931472
    %v169 = vlog2.pop %v158
    %v170 = vmul.f32 %v169, 0.6931472
    %v171 = vlog2.pop %v159
    %v172 = vmul.f32 %v171, 0.6931472
    %v173 = vlog2.pop %v160
    %v174 = vmul.f32 %v173, 0.6931472
    %v175 = vlog2.pop %v161
    %v176 = vmul.f32 %v175, 0.6931472
    %v177 = vlog2.pop %v162
    %v178 = vmul.f32 %v177, 0.6931472
    %v179 = vadd.f32 %v115, %v164
    %v180 = vadd.f32 %v116, %v166
    %v181 = vadd.f32 %v117, %v168
    %v182 = vadd.f32 %v118, %v170
    %v183 = vadd.f32 %v119, %v172
    %v184 = vadd.f32 %v120, %v174
    %v185 = vadd.f32 %v121, %v176
    %v186 = vadd.f32 %v122, %v178
    %v187 = vadd.f32 %v179, %v180
    %v188 = vadd.f32 %v187, %v181
    %v189 = vadd.f32 %v188, %v182
    %v190 = vadd.f32 %v189, %v183
    %v191 = vadd.f32 %v190, %v184
    %v192 = vadd.f32 %v191, %v185
    %v193 = vadd.f32 %v192, %v186
    %194 = vst [vmem:[#allocation5] sm:$0xff] %v193
    // Predicated region
    $region10: #{tpu_custom_call.1} parent=1 // pred_check
      _
    $region11: #{tpu_custom_call.1} parent=1 // pred_check_branch
      %196 = sbr.rel (0) target = $region13
    $region12: #{tpu_custom_call.1} parent=1 // pred_region
      %198 = vsyncadd [#allocation4], 0
      %s200 = sshll.u32 [#allocation5], 4
      %s201 = int_to_ptr.vmem [resolvable:$true] %s200
      %s202 = sshll.u32 %s1, 4
      %s203 = int_to_ptr.hbm [resolvable:$true] %s202
      %205 = dma.vmem_to_hbm [thread:$0]  %s201, 128, %s203, [#allocation4]
    $region13: #{tpu_custom_call.1} parent=1 // pred_fallthru
      _
    // Predicated region
    $region14: #{tpu_custom_call.1} parent=1 // pred_check
      _
    $region15: #{tpu_custom_call.1} parent=1 // pred_check_branch
      %207 = sbr.rel (0) target = $region17
    $region16: #{tpu_custom_call.1} parent=1 // pred_region
      %209 = dma.done [#allocation4], 128
    $region17: #{tpu_custom_call.1} parent=1 // pred_fallthru
      _
    %210 = vsyncpa [#allocation3], 1
    %211 = vsyncpa [#allocation4], 1

</llo_original>
